<compile_context>
chip_gen: v6e
topology: v6e:2x2x1
jax: 0.10.0
libtpu: 0.0.40
codegen_flags: <defaults>
</compile_context>

<pallas_src>
import jax
import jax.numpy as jnp
from jax import lax
from jax.experimental import pallas as pl
from jax.experimental.pallas import tpu as pltpu


# ----------------------------------------------------------------------------
# Pallas kernel: single-layer LSTM recurrence over the full (short) sequence.
# Gate order matches PyTorch: i, f, g, o  (packed along the 4H axis).
# Inputs:
#   xg_ref  : (S, B, 4H) f32  precomputed  emb[tok] @ W_ih.T + (b_ih + b_hh)
#   whh_ref : (H, 4H)    f32  (== weight_hh_l0.T)
# Output:
#   out_ref : (B, S*H)   f32  hidden states, lane-dense; reshaped outside.
# ----------------------------------------------------------------------------
def _lstm_kernel(xg_ref, whh_ref, out_ref):
    S, B, _ = xg_ref.shape
    H = whh_ref.shape[0]

    whh = whh_ref[...]                       # (H, 4H), resident across steps

    h = jnp.zeros((B, H), jnp.float32)
    c = jnp.zeros((B, H), jnp.float32)

    # S is a small static constant -> full unroll; h/c stay in vregs and the
    # scheduler can overlap the MXU of step t+1 with the EUP/VPU of step t.
    for t in range(S):
        gates = xg_ref[t] + jnp.dot(h, whh,
                                    preferred_element_type=jnp.float32)  # (B, 4H)

        # Full-vreg transcendentals (EUP slot); slice only for the combine.
        sig = jax.nn.sigmoid(gates)
        tnh = jnp.tanh(gates)

        i_g = sig[:, 0 * H:1 * H]
        f_g = sig[:, 1 * H:2 * H]
        g_g = tnh[:, 2 * H:3 * H]
        o_g = sig[:, 3 * H:4 * H]

        c = f_g * c + i_g * g_g
        h = o_g * jnp.tanh(c)

        # Static lane-offset store into the lane-dense output slab.
        out_ref[:, t * H:(t + 1) * H] = h


def _lstm_pallas(x_gates, whh_t):
    S, B, G = x_gates.shape                  # G == 4H
    H = whh_t.shape[0]

    return pl.pallas_call(
        _lstm_kernel,
        out_shape=jax.ShapeDtypeStruct((B, S * H), jnp.float32),
        grid=(1,),
        in_specs=[
            pl.BlockSpec((S, B, G), lambda i: (0, 0, 0)),
            pl.BlockSpec((H, G), lambda i: (0, 0)),
        ],
        out_specs=pl.BlockSpec((B, S * H), lambda i: (0, 0)),
        compiler_params=pltpu.CompilerParams(
            dimension_semantics=("arbitrary",)),
    )(x_gates, whh_t)


# ----------------------------------------------------------------------------
# ProgramEncoder forward:  tokens (B, S) int32 -> lstm_out (B, S, H) f32
# ----------------------------------------------------------------------------
@jax.jit
def program_encoder_forward(tokens, params):
    emb_table = params["embedding"].astype(jnp.float32)        # (V, E)
    w_ih = params["weight_ih_l0"].astype(jnp.float32)          # (4H, E)
    w_hh = params["weight_hh_l0"].astype(jnp.float32)          # (4H, H)
    bias = (params["bias_ih_l0"] + params["bias_hh_l0"]).astype(jnp.float32)

    B, S = tokens.shape
    H = w_hh.shape[1]

    # Fold embedding + input projection + bias into one tiny (V, 4H) table.
    proj_table = emb_table @ w_ih.T + bias[None, :]            # (V, 4H)

    # Time-major gather of per-token input gates; only the tiny (B, S) int32
    # token matrix is transposed, never a big activation tensor.
    x_gates = proj_table[tokens.T]                             # (S, B, 4H)
    whh_t = w_hh.T                                             # (H, 4H)

    out_flat = _lstm_pallas(x_gates, whh_t)                    # (B, S*H)
    return out_flat.reshape(B, S, H)                           # free reshape


# ----------------------------------------------------------------------------
# Pure-JAX reference (original math) for a correctness check.
# ----------------------------------------------------------------------------
def program_encoder_reference(tokens, params):
    emb_table = params["embedding"]
    w_ih = params["weight_ih_l0"]
    w_hh = params["weight_hh_l0"]
    b = params["bias_ih_l0"] + params["bias_hh_l0"]
    H = w_hh.shape[1]

    embedded = emb_table[tokens].astype(jnp.float32)           # (B, S, E)
    B = embedded.shape[0]

    def step(carry, x_t):
        h_prev, c_prev = carry
        gates = x_t @ w_ih.T + h_prev @ w_hh.T + b
        i_g = jax.nn.sigmoid(gates[:, 0 * H:1 * H])
        f_g = jax.nn.sigmoid(gates[:, 1 * H:2 * H])
        g_g = jnp.tanh(gates[:, 2 * H:3 * H])
        o_g = jax.nn.sigmoid(gates[:, 3 * H:4 * H])
        c_new = f_g * c_prev + i_g * g_g
        h_new = o_g * jnp.tanh(c_new)
        return (h_new, c_new), h_new

    init = (jnp.zeros((B, H), jnp.float32), jnp.zeros((B, H), jnp.float32))
    _, hs = lax.scan(step, init, jnp.transpose(embedded, (1, 0, 2)))
    return jnp.transpose(hs, (1, 0, 2))


# ----------------------------------------------------------------------------
# Deterministic parameter initialization (matches module __init__ shapes).
# ----------------------------------------------------------------------------
def init_params(key, vocab_size=10, embedding_dim=8, hidden_dim=32):
    ks = jax.random.split(key, 7)
    bound = 1.0 / jnp.sqrt(hidden_dim)
    params = {
        "embedding": jax.random.normal(ks[0], (vocab_size, embedding_dim),
                                       jnp.float32),
        "weight_ih_l0": jax.random.uniform(ks[1], (4 * hidden_dim, embedding_dim),
                                           jnp.float32, -bound, bound),
        "weight_hh_l0": jax.random.uniform(ks[2], (4 * hidden_dim, hidden_dim),
                                           jnp.float32, -bound, bound),
        "bias_ih_l0": jax.random.uniform(ks[3], (4 * hidden_dim,),
                                         jnp.float32, -bound, bound),
        "bias_hh_l0": jax.random.uniform(ks[4], (4 * hidden_dim,),
                                         jnp.float32, -bound, bound),
        # fc is unused by forward(); kept for parity with the module's __init__.
        "fc_weight": jax.random.uniform(ks[5], (hidden_dim, hidden_dim),
                                        jnp.float32, -bound, bound),
        "fc_bias": jax.random.uniform(ks[6], (hidden_dim,),
                                      jnp.float32, -bound, bound),
    }
    return params


if __name__ == "__main__":
    key = jax.random.PRNGKey(0)
    k_tok, k_par = jax.random.split(key)

    B, S = 2, 8
    vocab_size, embedding_dim, hidden_dim = 10, 8, 32

    tokens = jax.random.randint(k_tok, (B, S), 0, vocab_size, dtype=jnp.int32)
    params = init_params(k_par, vocab_size, embedding_dim, hidden_dim)

    out = program_encoder_forward(tokens, params)
    out = jax.block_until_ready(out)

    ref = program_encoder_reference(tokens, params)
    assert out.shape == (B, S, hidden_dim), out.shape
    assert jnp.allclose(out, ref, atol=1e-5, rtol=1e-5), \
        float(jnp.max(jnp.abs(out - ref)))

    print("KERNEL_OK")
</pallas_src>

<mosaic_0001>
module attributes {stable_mosaic.version = 11 : i64} {
  func.func @_lstm_kernel(%arg0: i32, %arg1: memref<8x2x128xf32, #tpu.memory_space<vmem>>, %arg2: memref<32x128xf32, #tpu.memory_space<vmem>>, %arg3: memref<2x256xf32, #tpu.memory_space<vmem>>) attributes {dimension_semantics = [#tpu.dimension_semantics<arbitrary>], iteration_bounds = array<i64: 1>, scalar_prefetch = 0 : i64, scratch_operands = 0 : i64, tpu.core_type = #tpu.core_type<tc>, window_params = [{pipeline_mode = #tpu.pipeline_mode<synchronous>, transform_indices = @transform_0, window_bounds = array<i64: 8, 2, 128>}, {pipeline_mode = #tpu.pipeline_mode<synchronous>, transform_indices = @transform_1, window_bounds = array<i64: 32, 128>}, {pipeline_mode = #tpu.pipeline_mode<synchronous>, transform_indices = @transform_2, window_bounds = array<i64: 2, 256>}]} {
    %c0 = arith.constant 0 : index
    %c0_0 = arith.constant 0 : index
    %0 = vector.load %arg2[%c0, %c0_0] : memref<32x128xf32, #tpu.memory_space<vmem>>, vector<32x128xf32>
    %cst = arith.constant 0.000000e+00 : f32
    %1 = vector.broadcast %cst : f32 to vector<2x32xf32>
    %cst_1 = arith.constant 0.000000e+00 : f32
    %2 = vector.broadcast %cst_1 : f32 to vector<2x32xf32>
    %c0_2 = arith.constant 0 : index
    %c0_3 = arith.constant 0 : index
    %c0_4 = arith.constant 0 : index
    %3 = vector.load %arg1[%c0_2, %c0_3, %c0_4] : memref<8x2x128xf32, #tpu.memory_space<vmem>>, vector<1x2x128xf32>
    %4 = vector.shape_cast %3 : vector<1x2x128xf32> to vector<2x128xf32>
    %cst_5 = arith.constant dense<0.000000e+00> : vector<2x128xf32>
    %5 = tpu.matmul %1, %0, %cst_5 {dimension_numbers = #tpu.dot_dimension_numbers<[1], [0], [0], [1], [0, 0, 1, 1], [], []>} : vector<2x32xf32>, vector<32x128xf32>, vector<2x128xf32> -> vector<2x128xf32>
    %6 = arith.addf %4, %5 : vector<2x128xf32>
    %7 = arith.negf %6 : vector<2x128xf32>
    %8 = math.exp %7 : vector<2x128xf32>
    %cst_6 = arith.constant 1.000000e+00 : f32
    %9 = vector.broadcast %cst_6 : f32 to vector<2x128xf32>
    %10 = arith.addf %9, %8 : vector<2x128xf32>
    %11 = arith.divf %9, %10 : vector<2x128xf32>
    %12 = math.tanh %6 : vector<2x128xf32>
    %13 = vector.extract_strided_slice %11 {offsets = [0, 0], sizes = [2, 32], strides = [1, 1]} : vector<2x128xf32> to vector<2x32xf32>
    %14 = vector.extract_strided_slice %11 {offsets = [0, 32], sizes = [2, 32], strides = [1, 1]} : vector<2x128xf32> to vector<2x32xf32>
    %15 = vector.extract_strided_slice %12 {offsets = [0, 64], sizes = [2, 32], strides = [1, 1]} : vector<2x128xf32> to vector<2x32xf32>
    %16 = vector.extract_strided_slice %11 {offsets = [0, 96], sizes = [2, 32], strides = [1, 1]} : vector<2x128xf32> to vector<2x32xf32>
    %17 = arith.mulf %14, %2 : vector<2x32xf32>
    %18 = arith.mulf %13, %15 : vector<2x32xf32>
    %19 = arith.addf %17, %18 : vector<2x32xf32>
    %20 = math.tanh %19 : vector<2x32xf32>
    %21 = arith.mulf %16, %20 : vector<2x32xf32>
    %c0_7 = arith.constant 0 : index
    %c0_8 = arith.constant 0 : index
    %22 = vector.load %arg3[%c0_7, %c0_8] : memref<2x256xf32, #tpu.memory_space<vmem>>, vector<2x32xf32>
    tpu.vector_store %arg3[%c0_7, %c0_8], %21 {strides = array<i32>} : memref<2x256xf32, #tpu.memory_space<vmem>>, vector<2x32xf32>,
    %c1 = arith.constant 1 : index
    %c0_9 = arith.constant 0 : index
    %c0_10 = arith.constant 0 : index
    %23 = vector.load %arg1[%c1, %c0_9, %c0_10] : memref<8x2x128xf32, #tpu.memory_space<vmem>>, vector<1x2x128xf32>
    %24 = vector.shape_cast %23 : vector<1x2x128xf32> to vector<2x128xf32>
    %cst_11 = arith.constant dense<0.000000e+00> : vector<2x128xf32>
    %25 = tpu.matmul %21, %0, %cst_11 {dimension_numbers = #tpu.dot_dimension_numbers<[1], [0], [0], [1], [0, 0, 1, 1], [], []>} : vector<2x32xf32>, vector<32x128xf32>, vector<2x128xf32> -> vector<2x128xf32>
    %26 = arith.addf %24, %25 : vector<2x128xf32>
    %27 = arith.negf %26 : vector<2x128xf32>
    %28 = math.exp %27 : vector<2x128xf32>
    %cst_12 = arith.constant 1.000000e+00 : f32
    %29 = vector.broadcast %cst_12 : f32 to vector<2x128xf32>
    %30 = arith.addf %29, %28 : vector<2x128xf32>
    %31 = arith.divf %29, %30 : vector<2x128xf32>
    %32 = math.tanh %26 : vector<2x128xf32>
    %33 = vector.extract_strided_slice %31 {offsets = [0, 0], sizes = [2, 32], strides = [1, 1]} : vector<2x128xf32> to vector<2x32xf32>
    %34 = vector.extract_strided_slice %31 {offsets = [0, 32], sizes = [2, 32], strides = [1, 1]} : vector<2x128xf32> to vector<2x32xf32>
    %35 = vector.extract_strided_slice %32 {offsets = [0, 64], sizes = [2, 32], strides = [1, 1]} : vector<2x128xf32> to vector<2x32xf32>
    %36 = vector.extract_strided_slice %31 {offsets = [0, 96], sizes = [2, 32], strides = [1, 1]} : vector<2x128xf32> to vector<2x32xf32>
    %37 = arith.mulf %34, %19 : vector<2x32xf32>
    %38 = arith.mulf %33, %35 : vector<2x32xf32>
    %39 = arith.addf %37, %38 : vector<2x32xf32>
    %40 = math.tanh %39 : vector<2x32xf32>
    %41 = arith.mulf %36, %40 : vector<2x32xf32>
    %c0_13 = arith.constant 0 : index
    %c32 = arith.constant 32 : index
    %42 = vector.load %arg3[%c0_13, %c32] : memref<2x256xf32, #tpu.memory_space<vmem>>, vector<2x32xf32>
    tpu.vector_store %arg3[%c0_13, %c32], %41 {strides = array<i32>} : memref<2x256xf32, #tpu.memory_space<vmem>>, vector<2x32xf32>,
    %c2 = arith.constant 2 : index
    %c0_14 = arith.constant 0 : index
    %c0_15 = arith.constant 0 : index
    %43 = vector.load %arg1[%c2, %c0_14, %c0_15] : memref<8x2x128xf32, #tpu.memory_space<vmem>>, vector<1x2x128xf32>
    %44 = vector.shape_cast %43 : vector<1x2x128xf32> to vector<2x128xf32>
    %cst_16 = arith.constant dense<0.000000e+00> : vector<2x128xf32>
    %45 = tpu.matmul %41, %0, %cst_16 {dimension_numbers = #tpu.dot_dimension_numbers<[1], [0], [0], [1], [0, 0, 1, 1], [], []>} : vector<2x32xf32>, vector<32x128xf32>, vector<2x128xf32> -> vector<2x128xf32>
    %46 = arith.addf %44, %45 : vector<2x128xf32>
    %47 = arith.negf %46 : vector<2x128xf32>
    %48 = math.exp %47 : vector<2x128xf32>
    %cst_17 = arith.constant 1.000000e+00 : f32
    %49 = vector.broadcast %cst_17 : f32 to vector<2x128xf32>
    %50 = arith.addf %49, %48 : vector<2x128xf32>
    %51 = arith.divf %49, %50 : vector<2x128xf32>
    %52 = math.tanh %46 : vector<2x128xf32>
    %53 = vector.extract_strided_slice %51 {offsets = [0, 0], sizes = [2, 32], strides = [1, 1]} : vector<2x128xf32> to vector<2x32xf32>
    %54 = vector.extract_strided_slice %51 {offsets = [0, 32], sizes = [2, 32], strides = [1, 1]} : vector<2x128xf32> to vector<2x32xf32>
    %55 = vector.extract_strided_slice %52 {offsets = [0, 64], sizes = [2, 32], strides = [1, 1]} : vector<2x128xf32> to vector<2x32xf32>
    %56 = vector.extract_strided_slice %51 {offsets = [0, 96], sizes = [2, 32], strides = [1, 1]} : vector<2x128xf32> to vector<2x32xf32>
    %57 = arith.mulf %54, %39 : vector<2x32xf32>
    %58 = arith.mulf %53, %55 : vector<2x32xf32>
    %59 = arith.addf %57, %58 : vector<2x32xf32>
    %60 = math.tanh %59 : vector<2x32xf32>
    %61 = arith.mulf %56, %60 : vector<2x32xf32>
    %c0_18 = arith.constant 0 : index
    %c64 = arith.constant 64 : index
    %62 = vector.load %arg3[%c0_18, %c64] : memref<2x256xf32, #tpu.memory_space<vmem>>, vector<2x32xf32>
    tpu.vector_store %arg3[%c0_18, %c64], %61 {strides = array<i32>} : memref<2x256xf32, #tpu.memory_space<vmem>>, vector<2x32xf32>,
    %c3 = arith.constant 3 : index
    %c0_19 = arith.constant 0 : index
    %c0_20 = arith.constant 0 : index
    %63 = vector.load %arg1[%c3, %c0_19, %c0_20] : memref<8x2x128xf32, #tpu.memory_space<vmem>>, vector<1x2x128xf32>
    %64 = vector.shape_cast %63 : vector<1x2x128xf32> to vector<2x128xf32>
    %cst_21 = arith.constant dense<0.000000e+00> : vector<2x128xf32>
    %65 = tpu.matmul %61, %0, %cst_21 {dimension_numbers = #tpu.dot_dimension_numbers<[1], [0], [0], [1], [0, 0, 1, 1], [], []>} : vector<2x32xf32>, vector<32x128xf32>, vector<2x128xf32> -> vector<2x128xf32>
    %66 = arith.addf %64, %65 : vector<2x128xf32>
    %67 = arith.negf %66 : vector<2x128xf32>
    %68 = math.exp %67 : vector<2x128xf32>
    %cst_22 = arith.constant 1.000000e+00 : f32
    %69 = vector.broadcast %cst_22 : f32 to vector<2x128xf32>
    %70 = arith.addf %69, %68 : vector<2x128xf32>
    %71 = arith.divf %69, %70 : vector<2x128xf32>
    %72 = math.tanh %66 : vector<2x128xf32>
    %73 = vector.extract_strided_slice %71 {offsets = [0, 0], sizes = [2, 32], strides = [1, 1]} : vector<2x128xf32> to vector<2x32xf32>
    %74 = vector.extract_strided_slice %71 {offsets = [0, 32], sizes = [2, 32], strides = [1, 1]} : vector<2x128xf32> to vector<2x32xf32>
    %75 = vector.extract_strided_slice %72 {offsets = [0, 64], sizes = [2, 32], strides = [1, 1]} : vector<2x128xf32> to vector<2x32xf32>
    %76 = vector.extract_strided_slice %71 {offsets = [0, 96], sizes = [2, 32], strides = [1, 1]} : vector<2x128xf32> to vector<2x32xf32>
    %77 = arith.mulf %74, %59 : vector<2x32xf32>
    %78 = arith.mulf %73, %75 : vector<2x32xf32>
    %79 = arith.addf %77, %78 : vector<2x32xf32>
    %80 = math.tanh %79 : vector<2x32xf32>
    %81 = arith.mulf %76, %80 : vector<2x32xf32>
    %c0_23 = arith.constant 0 : index
    %c96 = arith.constant 96 : index
    %82 = vector.load %arg3[%c0_23, %c96] : memref<2x256xf32, #tpu.memory_space<vmem>>, vector<2x32xf32>
    tpu.vector_store %arg3[%c0_23, %c96], %81 {strides = array<i32>} : memref<2x256xf32, #tpu.memory_space<vmem>>, vector<2x32xf32>,
    %c4 = arith.constant 4 : index
    %c0_24 = arith.constant 0 : index
    %c0_25 = arith.constant 0 : index
    %83 = vector.load %arg1[%c4, %c0_24, %c0_25] : memref<8x2x128xf32, #tpu.memory_space<vmem>>, vector<1x2x128xf32>
    %84 = vector.shape_cast %83 : vector<1x2x128xf32> to vector<2x128xf32>
    %cst_26 = arith.constant dense<0.000000e+00> : vector<2x128xf32>
    %85 = tpu.matmul %81, %0, %cst_26 {dimension_numbers = #tpu.dot_dimension_numbers<[1], [0], [0], [1], [0, 0, 1, 1], [], []>} : vector<2x32xf32>, vector<32x128xf32>, vector<2x128xf32> -> vector<2x128xf32>
    %86 = arith.addf %84, %85 : vector<2x128xf32>
    %87 = arith.negf %86 : vector<2x128xf32>
    %88 = math.exp %87 : vector<2x128xf32>
    %cst_27 = arith.constant 1.000000e+00 : f32
    %89 = vector.broadcast %cst_27 : f32 to vector<2x128xf32>
    %90 = arith.addf %89, %88 : vector<2x128xf32>
    %91 = arith.divf %89, %90 : vector<2x128xf32>
    %92 = math.tanh %86 : vector<2x128xf32>
    %93 = vector.extract_strided_slice %91 {offsets = [0, 0], sizes = [2, 32], strides = [1, 1]} : vector<2x128xf32> to vector<2x32xf32>
    %94 = vector.extract_strided_slice %91 {offsets = [0, 32], sizes = [2, 32], strides = [1, 1]} : vector<2x128xf32> to vector<2x32xf32>
    %95 = vector.extract_strided_slice %92 {offsets = [0, 64], sizes = [2, 32], strides = [1, 1]} : vector<2x128xf32> to vector<2x32xf32>
    %96 = vector.extract_strided_slice %91 {offsets = [0, 96], sizes = [2, 32], strides = [1, 1]} : vector<2x128xf32> to vector<2x32xf32>
    %97 = arith.mulf %94, %79 : vector<2x32xf32>
    %98 = arith.mulf %93, %95 : vector<2x32xf32>
    %99 = arith.addf %97, %98 : vector<2x32xf32>
    %100 = math.tanh %99 : vector<2x32xf32>
    %101 = arith.mulf %96, %100 : vector<2x32xf32>
    %c0_28 = arith.constant 0 : index
    %c128 = arith.constant 128 : index
    %102 = vector.load %arg3[%c0_28, %c128] : memref<2x256xf32, #tpu.memory_space<vmem>>, vector<2x32xf32>
    tpu.vector_store %arg3[%c0_28, %c128], %101 {strides = array<i32>} : memref<2x256xf32, #tpu.memory_space<vmem>>, vector<2x32xf32>,
    %c5 = arith.constant 5 : index
    %c0_29 = arith.constant 0 : index
    %c0_30 = arith.constant 0 : index
    %103 = vector.load %arg1[%c5, %c0_29, %c0_30] : memref<8x2x128xf32, #tpu.memory_space<vmem>>, vector<1x2x128xf32>
    %104 = vector.shape_cast %103 : vector<1x2x128xf32> to vector<2x128xf32>
    %cst_31 = arith.constant dense<0.000000e+00> : vector<2x128xf32>
    %105 = tpu.matmul %101, %0, %cst_31 {dimension_numbers = #tpu.dot_dimension_numbers<[1], [0], [0], [1], [0, 0, 1, 1], [], []>} : vector<2x32xf32>, vector<32x128xf32>, vector<2x128xf32> -> vector<2x128xf32>
    %106 = arith.addf %104, %105 : vector<2x128xf32>
    %107 = arith.negf %106 : vector<2x128xf32>
    %108 = math.exp %107 : vector<2x128xf32>
    %cst_32 = arith.constant 1.000000e+00 : f32
    %109 = vector.broadcast %cst_32 : f32 to vector<2x128xf32>
    %110 = arith.addf %109, %108 : vector<2x128xf32>
    %111 = arith.divf %109, %110 : vector<2x128xf32>
    %112 = math.tanh %106 : vector<2x128xf32>
    %113 = vector.extract_strided_slice %111 {offsets = [0, 0], sizes = [2, 32], strides = [1, 1]} : vector<2x128xf32> to vector<2x32xf32>
    %114 = vector.extract_strided_slice %111 {offsets = [0, 32], sizes = [2, 32], strides = [1, 1]} : vector<2x128xf32> to vector<2x32xf32>
    %115 = vector.extract_strided_slice %112 {offsets = [0, 64], sizes = [2, 32], strides = [1, 1]} : vector<2x128xf32> to vector<2x32xf32>
    %116 = vector.extract_strided_slice %111 {offsets = [0, 96], sizes = [2, 32], strides = [1, 1]} : vector<2x128xf32> to vector<2x32xf32>
    %117 = arith.mulf %114, %99 : vector<2x32xf32>
    %118 = arith.mulf %113, %115 : vector<2x32xf32>
    %119 = arith.addf %117, %118 : vector<2x32xf32>
    %120 = math.tanh %119 : vector<2x32xf32>
    %121 = arith.mulf %116, %120 : vector<2x32xf32>
    %c0_33 = arith.constant 0 : index
    %c160 = arith.constant 160 : index
    %122 = vector.load %arg3[%c0_33, %c160] : memref<2x256xf32, #tpu.memory_space<vmem>>, vector<2x32xf32>
    tpu.vector_store %arg3[%c0_33, %c160], %121 {strides = array<i32>} : memref<2x256xf32, #tpu.memory_space<vmem>>, vector<2x32xf32>,
    %c6 = arith.constant 6 : index
    %c0_34 = arith.constant 0 : index
    %c0_35 = arith.constant 0 : index
    %123 = vector.load %arg1[%c6, %c0_34, %c0_35] : memref<8x2x128xf32, #tpu.memory_space<vmem>>, vector<1x2x128xf32>
    %124 = vector.shape_cast %123 : vector<1x2x128xf32> to vector<2x128xf32>
    %cst_36 = arith.constant dense<0.000000e+00> : vector<2x128xf32>
    %125 = tpu.matmul %121, %0, %cst_36 {dimension_numbers = #tpu.dot_dimension_numbers<[1], [0], [0], [1], [0, 0, 1, 1], [], []>} : vector<2x32xf32>, vector<32x128xf32>, vector<2x128xf32> -> vector<2x128xf32>
    %126 = arith.addf %124, %125 : vector<2x128xf32>
    %127 = arith.negf %126 : vector<2x128xf32>
    %128 = math.exp %127 : vector<2x128xf32>
    %cst_37 = arith.constant 1.000000e+00 : f32
    %129 = vector.broadcast %cst_37 : f32 to vector<2x128xf32>
    %130 = arith.addf %129, %128 : vector<2x128xf32>
    %131 = arith.divf %129, %130 : vector<2x128xf32>
    %132 = math.tanh %126 : vector<2x128xf32>
    %133 = vector.extract_strided_slice %131 {offsets = [0, 0], sizes = [2, 32], strides = [1, 1]} : vector<2x128xf32> to vector<2x32xf32>
    %134 = vector.extract_strided_slice %131 {offsets = [0, 32], sizes = [2, 32], strides = [1, 1]} : vector<2x128xf32> to vector<2x32xf32>
    %135 = vector.extract_strided_slice %132 {offsets = [0, 64], sizes = [2, 32], strides = [1, 1]} : vector<2x128xf32> to vector<2x32xf32>
    %136 = vector.extract_strided_slice %131 {offsets = [0, 96], sizes = [2, 32], strides = [1, 1]} : vector<2x128xf32> to vector<2x32xf32>
    %137 = arith.mulf %134, %119 : vector<2x32xf32>
    %138 = arith.mulf %133, %135 : vector<2x32xf32>
    %139 = arith.addf %137, %138 : vector<2x32xf32>
    %140 = math.tanh %139 : vector<2x32xf32>
    %141 = arith.mulf %136, %140 : vector<2x32xf32>
    %c0_38 = arith.constant 0 : index
    %c192 = arith.constant 192 : index
    %142 = vector.load %arg3[%c0_38, %c192] : memref<2x256xf32, #tpu.memory_space<vmem>>, vector<2x32xf32>
    tpu.vector_store %arg3[%c0_38, %c192], %141 {strides = array<i32>} : memref<2x256xf32, #tpu.memory_space<vmem>>, vector<2x32xf32>,
    %c7 = arith.constant 7 : index
    %c0_39 = arith.constant 0 : index
    %c0_40 = arith.constant 0 : index
    %143 = vector.load %arg1[%c7, %c0_39, %c0_40] : memref<8x2x128xf32, #tpu.memory_space<vmem>>, vector<1x2x128xf32>
    %144 = vector.shape_cast %143 : vector<1x2x128xf32> to vector<2x128xf32>
    %cst_41 = arith.constant dense<0.000000e+00> : vector<2x128xf32>
    %145 = tpu.matmul %141, %0, %cst_41 {dimension_numbers = #tpu.dot_dimension_numbers<[1], [0], [0], [1], [0, 0, 1, 1], [], []>} : vector<2x32xf32>, vector<32x128xf32>, vector<2x128xf32> -> vector<2x128xf32>
    %146 = arith.addf %144, %145 : vector<2x128xf32>
    %147 = arith.negf %146 : vector<2x128xf32>
    %148 = math.exp %147 : vector<2x128xf32>
    %cst_42 = arith.constant 1.000000e+00 : f32
    %149 = vector.broadcast %cst_42 : f32 to vector<2x128xf32>
    %150 = arith.addf %149, %148 : vector<2x128xf32>
    %151 = arith.divf %149, %150 : vector<2x128xf32>
    %152 = math.tanh %146 : vector<2x128xf32>
    %153 = vector.extract_strided_slice %151 {offsets = [0, 0], sizes = [2, 32], strides = [1, 1]} : vector<2x128xf32> to vector<2x32xf32>
    %154 = vector.extract_strided_slice %151 {offsets = [0, 32], sizes = [2, 32], strides = [1, 1]} : vector<2x128xf32> to vector<2x32xf32>
    %155 = vector.extract_strided_slice %152 {offsets = [0, 64], sizes = [2, 32], strides = [1, 1]} : vector<2x128xf32> to vector<2x32xf32>
    %156 = vector.extract_strided_slice %151 {offsets = [0, 96], sizes = [2, 32], strides = [1, 1]} : vector<2x128xf32> to vector<2x32xf32>
    %157 = arith.mulf %154, %139 : vector<2x32xf32>
    %158 = arith.mulf %153, %155 : vector<2x32xf32>
    %159 = arith.addf %157, %158 : vector<2x32xf32>
    %160 = math.tanh %159 : vector<2x32xf32>
    %161 = arith.mulf %156, %160 : vector<2x32xf32>
    %c0_43 = arith.constant 0 : index
    %c224 = arith.constant 224 : index
    %162 = vector.load %arg3[%c0_43, %c224] : memref<2x256xf32, #tpu.memory_space<vmem>>, vector<2x32xf32>
    tpu.vector_store %arg3[%c0_43, %c224], %161 {strides = array<i32>} : memref<2x256xf32, #tpu.memory_space<vmem>>, vector<2x32xf32>,
    return
  }
  func.func @transform_0(%arg0: i32) -> (i32, i32, i32) {
    %c0_i32 = arith.constant 0 : i32
    %c0_i32_0 = arith.constant 0 : i32
    %c0_i32_1 = arith.constant 0 : i32
    %c0_i32_2 = arith.constant 0 : i32
    return %c0_i32, %c0_i32_0, %c0_i32_1 : i32, i32, i32
  }
  func.func @transform_1(%arg0: i32) -> (i32, i32) {
    %c0_i32 = arith.constant 0 : i32
    %c0_i32_0 = arith.constant 0 : i32
    %c0_i32_1 = arith.constant 0 : i32
    return %c0_i32, %c0_i32_0 : i32, i32
  }
  func.func @transform_2(%arg0: i32) -> (i32, i32) {
    %c0_i32 = arith.constant 0 : i32
    %c0_i32_0 = arith.constant 0 : i32
    %c0_i32_1 = arith.constant 0 : i32
    return %c0_i32, %c0_i32_0 : i32, i32
  }
}

</mosaic_0001>

<llo_original>
// kernel: program_encoder_forward.1
$region0: #{program_encoder_forward.1}
  #allocation0 [shape = 'u32[]', space=smem, size = 0x4, offset = 0x4, fixed_abs, tag = 'smem constant byte address 0x4 - core index']
  #allocation1 [shape = 'u32[144,128]{1,0:T(1,128)}', space=vmem, size = 0x12000, scoped, tag = 'internal scratch']
  %s0 = inlined_call_operand.vmem [shape: f32[8,2,128], index: 0, kind: input, shape index: {}]
  %s1 = inlined_call_operand.vmem [shape: f32[32,128], index: 1, kind: input, shape index: {}]
  %s2 = inlined_call_operand.vmem [shape: f32[2,256], index: 2, kind: output, shape index: {}]
  %s3 = sld [smem:[#allocation0]]
  $region18: #{program_encoder_forward.1} parent=0
    _
  %s5 = ssub.s32 1, %s3
  %s6 = scalar_select 0, %s5, %s3
  // Predicated region
  $region2: #{program_encoder_forward.1} parent=0 // pred_check
    _
  $region3: #{program_encoder_forward.1} parent=0 // pred_check_branch
    %8 = sbr.rel (0) target = $region5
  $region4: #{program_encoder_forward.1} parent=0 // pred_region
    _
  $region5: #{program_encoder_forward.1} parent=0 // pred_fallthru
    _
  // Predicated region
  $region6: #{program_encoder_forward.1} parent=0 // pred_check
    _
  $region7: #{program_encoder_forward.1} parent=0 // pred_check_branch
    %10 = sbr.rel (0) target = $region9
  $region8: #{program_encoder_forward.1} parent=0 // pred_region
    _
  $region9: #{program_encoder_forward.1} parent=0 // pred_fallthru
    _
  %v11 = vld [vmem:[%s1] sm:$0xff]
  %v12 = vld [vmem:[%s1 + $0x8] sm:$0xff]
  %v13 = vld [vmem:[%s1 + $0x10] sm:$0xff]
  %v14 = vld [vmem:[%s1 + $0x18] sm:$0xff]
  %v15 = vld [vmem:[%s0] sm:$0x3]
  %vm16 = vcmask 261120
  %v18 = vsel %vm16, 0.0, 0
  %20 = vmatprep.subr.mxu0 0.0
  %21 = vmatpush1.msra.mxu0 0.0
  %22 = vmatprep.subr.mxu0 0.0
  %23 = vmatpush1.msra.mxu0 0.0
  %24 = vmatprep.subr.mxu0 0.0
  %25 = vmatpush1.msra.mxu0 0.0
  %26 = vmatprep.subr.mxu0 0.0
  %27 = vmatpush1.msra.mxu0 0.0
  %28 = vmatprep.subr.mxu0 0.0
  %29 = vmatpush1.msra.mxu0 0.0
  %30 = vmatprep.subr.mxu0 0.0
  %31 = vmatpush1.msra.mxu0 0.0
  %32 = vmatprep.subr.mxu0 0.0
  %33 = vmatpush1.msra.mxu0 0.0
  %34 = vmatprep.subr.mxu0 0.0
  %35 = vmatpush1.msra.mxu0 0.0
  %36 = vmatprep.subr.mxu0 0.0
  %37 = vmatpush1.msra.mxu0 0.0
  %38 = vmatprep.subr.mxu0 0.0
  %39 = vmatpush1.msra.mxu0 0.0
  %40 = vmatprep.subr.mxu0 0.0
  %41 = vmatpush1.msra.mxu0 0.0
  %42 = vmatprep.subr.mxu0 0.0
  %43 = vmatpush1.msra.mxu0 0.0
  %44 = vmatprep.subr.mxu0 0.0
  %45 = vmatpush1.msra.mxu0 %v14
  %46 = vmatprep.subr.mxu0 0.0
  %47 = vmatpush1.msra.mxu0 %v13
  %48 = vmatprep.subr.mxu0 0.0
  %49 = vmatpush1.msra.mxu0 %v12
  %50 = vmatprep.subr.mxu0 0.0
  %51 = vmatpush1.msra.mxu0 %v11
  %52 = vmatprep.subr.mxu0 0.0
  %53 = vmatpush2.msra.mxu0 0.0
  %54 = vmatprep.subr.mxu0 0.0
  %55 = vmatpush2.msra.mxu0 0.0
  %56 = vmatprep.subr.mxu0 0.0
  %57 = vmatpush2.msra.mxu0 0.0
  %58 = vmatprep.subr.mxu0 0.0
  %59 = vmatpush2.msra.mxu0 0.0
  %60 = vmatprep.subr.mxu0 0.0
  %61 = vmatpush2.msra.mxu0 0.0
  %62 = vmatprep.subr.mxu0 0.0
  %63 = vmatpush2.msra.mxu0 0.0
  %64 = vmatprep.subr.mxu0 0.0
  %65 = vmatpush2.msra.mxu0 0.0
  %66 = vmatprep.subr.mxu0 0.0
  %67 = vmatpush2.msra.mxu0 0.0
  %68 = vmatprep.subr.mxu0 0.0
  %69 = vmatpush2.msra.mxu0 0.0
  %70 = vmatprep.subr.mxu0 0.0
  %71 = vmatpush2.msra.mxu0 0.0
  %72 = vmatprep.subr.mxu0 0.0
  %73 = vmatpush2.msra.mxu0 0.0
  %74 = vmatprep.subr.mxu0 0.0
  %75 = vmatpush2.msra.mxu0 0.0
  %76 = vmatprep.subr.mxu0 0.0
  %77 = vmatpush2.msra.mxu0 0.0
  %78 = vmatprep.subr.mxu0 0.0
  %79 = vmatpush2.msra.mxu0 0.0
  %80 = vmatprep.subr.mxu0 0.0
  %81 = vmatpush2.msra.mxu0 0.0
  %82 = vmatprep.subr.mxu0 0.0
  %83 = vmatpush2.msra.mxu0 0.0
  %84 = vmatprep.mubr.f32.mxu0 0.0
  %85 = vmatmul.mubr.f32.gmra.mxu0 %v18
  %v86 = vpop.f32.mrf.mxu0
  %v87 = vadd.f32 0.0, %v86
  %v88 = vpop.f32.mrf.mxu0
  %89 = vdwg.mxu0
  %v90 = vadd.f32 %v15, %v87
  %v91 = vxor.u32 %v90, 2147483648
  %v92 = vmul.f32 %v91, 1.442695
  %v93 = vpow.pop %v92
  %v94 = vadd.f32 %v93, 1.0
  %v95 = vrcp.pop %v94
  %v96 = vmul.f32 1.0, %v95
  %v97 = vtanh.pop %v90
  %v98 = vmul.f32 %v96, 0.0
  %100 = vrot.lane.b32.xlu0 %v97, 64
  %v101 = vpop.permute.xlu0 %100
  %v103 = vmul.f32 %v96, %v101
  %105 = vrot.lane.b32.xlu0 %v103, 32
  %v106 = vpop.permute.xlu0 %105
  %v108 = vadd.f32 %v98, %v106
  %v109 = vtanh.pop %v108
  %111 = vrot.lane.b32.xlu0 %v109, 64
  %v112 = vpop.permute.xlu0 %111
  %v114 = vmul.f32 %v96, %v112
  %v117 = vunpack.c.l.s4 1983009808
  %v118 = vunpack.c.0.s8 %v117
  %v119 = vlaneseq
  %v120 = vshrl.u32 %v119, 7
  %v121 = vsub.s32 %v118, %v120
  %v122 = vrot.slane %v114, %v121
  %123 = vrot.lane.b32.xlu0 %v122, 32
  %v124 = vpop.permute.xlu0 %123
  %vm126 = vcmask 254976
  %127 = vst.msk [vmem:[%s2] sm:$0x3] %vm126, %v124
  %s128 = scalar_lea.vmem %s0, 2
  %v129 = vld [vmem:[%s128] sm:$0x3]
  %130 = vrot.lane.b32.xlu0 %v114, 32
  %v131 = vpop.permute.xlu0 %130
  %v132 = vsel %vm16, %v131, 0
  %134 = vmatprep.subr.mxu0 0.0
  %135 = vmatpush1.msra.mxu0 0.0
  %136 = vmatprep.subr.mxu0 0.0
  %137 = vmatpush1.msra.mxu0 0.0
  %138 = vmatprep.subr.mxu0 0.0
  %139 = vmatpush1.msra.mxu0 0.0
  %140 = vmatprep.subr.mxu0 0.0
  %141 = vmatpush1.msra.mxu0 0.0
  %142 = vmatprep.subr.mxu0 0.0
  %143 = vmatpush1.msra.mxu0 0.0
  %144 = vmatprep.subr.mxu0 0.0
  %145 = vmatpush1.msra.mxu0 0.0
  %146 = vmatprep.subr.mxu0 0.0
  %147 = vmatpush1.msra.mxu0 0.0
  %148 = vmatprep.subr.mxu0 0.0
  %149 = vmatpush1.msra.mxu0 0.0
  %150 = vmatprep.subr.mxu0 0.0
  %151 = vmatpush1.msra.mxu0 0.0
  %152 = vmatprep.subr.mxu0 0.0
  %153 = vmatpush1.msra.mxu0 0.0
  %154 = vmatprep.subr.mxu0 0.0
  %155 = vmatpush1.msra.mxu0 0.0
  %156 = vmatprep.subr.mxu0 0.0
  %157 = vmatpush1.msra.mxu0 0.0
  %158 = vmatprep.subr.mxu0 0.0
  %159 = vmatpush1.msra.mxu0 %v14
  %160 = vmatprep.subr.mxu0 0.0
  %161 = vmatpush1.msra.mxu0 %v13
  %162 = vmatprep.subr.mxu0 0.0
  %163 = vmatpush1.msra.mxu0 %v12
  %164 = vmatprep.subr.mxu0 0.0
  %165 = vmatpush1.msra.mxu0 %v11
  %166 = vmatprep.subr.mxu0 0.0
  %167 = vmatpush2.msra.mxu0 0.0
  %168 = vmatprep.subr.mxu0 0.0
  %169 = vmatpush2.msra.mxu0 0.0
  %170 = vmatprep.subr.mxu0 0.0
  %171 = vmatpush2.msra.mxu0 0.0
  %172 = vmatprep.subr.mxu0 0.0
  %173 = vmatpush2.msra.mxu0 0.0
  %174 = vmatprep.subr.mxu0 0.0
  %175 = vmatpush2.msra.mxu0 0.0
  %176 = vmatprep.subr.mxu0 0.0
  %177 = vmatpush2.msra.mxu0 0.0
  %178 = vmatprep.subr.mxu0 0.0
  %179 = vmatpush2.msra.mxu0 0.0
  %180 = vmatprep.subr.mxu0 0.0
  %181 = vmatpush2.msra.mxu0 0.0
  %182 = vmatprep.subr.mxu0 0.0
  %183 = vmatpush2.msra.mxu0 0.0
  %184 = vmatprep.subr.mxu0 0.0
  %185 = vmatpush2.msra.mxu0 0.0
  %186 = vmatprep.subr.mxu0 0.0
  %187 = vmatpush2.msra.mxu0 0.0
  %188 = vmatprep.subr.mxu0 0.0
  %189 = vmatpush2.msra.mxu0 0.0
  %190 = vmatprep.subr.mxu0 0.0
  %191 = vmatpush2.msra.mxu0 0.0
  %192 = vmatprep.subr.mxu0 0.0
  %193 = vmatpush2.msra.mxu0 0.0
  %194 = vmatprep.subr.mxu0 0.0
  %195 = vmatpush2.msra.mxu0 0.0
  %196 = vmatprep.subr.mxu0 0.0
  %197 = vmatpush2.msra.mxu0 0.0
  %198 = vmatprep.mubr.f32.mxu0 0.0
  %199 = vmatmul.mubr.f32.gmra.mxu0 %v132
  %v200 = vpop.f32.mrf.mxu0
  %v201 = vadd.f32 0.0, %v200
  %v202 = vpop.f32.mrf.mxu0
  %203 = vdwg.mxu0
  %v204 = vadd.f32 %v129, %v201
  %v205 = vxor.u32 %v204, 2147483648
  %v206 = vmul.f32 %v205, 1.442695
  %v207 = vpow.pop %v206
  %v208 = vadd.f32 %v207, 1.0
  %v209 = vrcp.pop %v208
  %v210 = vmul.f32 1.0, %v209
  %v211 = vtanh.pop %v204
  %v212 = vmul.f32 %v210, %v108
  %214 = vrot.lane.b32.xlu0 %v211, 64
  %v215 = vpop.permute.xlu0 %214
  %v217 = vmul.f32 %v210, %v215
  %219 = vrot.lane.b32.xlu0 %v217, 32
  %v220 = vpop.permute.xlu0 %219
  %v222 = vadd.f32 %v212, %v220
  %v223 = vtanh.pop %v222
  %225 = vrot.lane.b32.xlu0 %v223, 64
  %v226 = vpop.permute.xlu0 %225
  %v228 = vmul.f32 %v210, %v226
  %v231 = vunpack.c.l.s4 1983009808
  %v232 = vunpack.c.0.s8 %v231
  %v233 = vlaneseq
  %v234 = vshrl.u32 %v233, 7
  %v235 = vsub.s32 %v232, %v234
  %v236 = vrot.slane %v228, %v235
  %237 = vrot.lane.b32.xlu0 %v236, 64
  %v238 = vpop.permute.xlu0 %237
  %vm240 = vcmask 517376
  %241 = vst.msk [vmem:[%s2] sm:$0x3] %vm240, %v238
  %s242 = scalar_lea.vmem %s0, 4
  %v243 = vld [vmem:[%s242] sm:$0x3]
  %244 = vrot.lane.b32.xlu0 %v228, 32
  %v245 = vpop.permute.xlu0 %244
  %v246 = vsel %vm16, %v245, 0
  %248 = vmatprep.subr.mxu0 0.0
  %249 = vmatpush1.msra.mxu0 0.0
  %250 = vmatprep.subr.mxu0 0.0
  %251 = vmatpush1.msra.mxu0 0.0
  %252 = vmatprep.subr.mxu0 0.0
  %253 = vmatpush1.msra.mxu0 0.0
  %254 = vmatprep.subr.mxu0 0.0
  %255 = vmatpush1.msra.mxu0 0.0
  %256 = vmatprep.subr.mxu0 0.0
  %257 = vmatpush1.msra.mxu0 0.0
  %258 = vmatprep.subr.mxu0 0.0
  %259 = vmatpush1.msra.mxu0 0.0
  %260 = vmatprep.subr.mxu0 0.0
  %261 = vmatpush1.msra.mxu0 0.0
  %262 = vmatprep.subr.mxu0 0.0
  %263 = vmatpush1.msra.mxu0 0.0
  %264 = vmatprep.subr.mxu0 0.0
  %265 = vmatpush1.msra.mxu0 0.0
  %266 = vmatprep.subr.mxu0 0.0
  %267 = vmatpush1.msra.mxu0 0.0
  %268 = vmatprep.subr.mxu0 0.0
  %269 = vmatpush1.msra.mxu0 0.0
  %270 = vmatprep.subr.mxu0 0.0
  %271 = vmatpush1.msra.mxu0 0.0
  %272 = vmatprep.subr.mxu0 0.0
  %273 = vmatpush1.msra.mxu0 %v14
  %274 = vmatprep.subr.mxu0 0.0
  %275 = vmatpush1.msra.mxu0 %v13
  %276 = vmatprep.subr.mxu0 0.0
  %277 = vmatpush1.msra.mxu0 %v12
  %278 = vmatprep.subr.mxu0 0.0
  %279 = vmatpush1.msra.mxu0 %v11
  %280 = vmatprep.subr.mxu0 0.0
  %281 = vmatpush2.msra.mxu0 0.0
  %282 = vmatprep.subr.mxu0 0.0
  %283 = vmatpush2.msra.mxu0 0.0
  %284 = vmatprep.subr.mxu0 0.0
  %285 = vmatpush2.msra.mxu0 0.0
  %286 = vmatprep.subr.mxu0 0.0
  %287 = vmatpush2.msra.mxu0 0.0
  %288 = vmatprep.subr.mxu0 0.0
  %289 = vmatpush2.msra.mxu0 0.0
  %290 = vmatprep.subr.mxu0 0.0
  %291 = vmatpush2.msra.mxu0 0.0
  %292 = vmatprep.subr.mxu0 0.0
  %293 = vmatpush2.msra.mxu0 0.0
  %294 = vmatprep.subr.mxu0 0.0
  %295 = vmatpush2.msra.mxu0 0.0
  %296 = vmatprep.subr.mxu0 0.0
  %297 = vmatpush2.msra.mxu0 0.0
  %298 = vmatprep.subr.mxu0 0.0
  %299 = vmatpush2.msra.mxu0 0.0
  %300 = vmatprep.subr.mxu0 0.0
  %301 = vmatpush2.msra.mxu0 0.0
  %302 = vmatprep.subr.mxu0 0.0
  %303 = vmatpush2.msra.mxu0 0.0
  %304 = vmatprep.subr.mxu0 0.0
  %305 = vmatpush2.msra.mxu0 0.0
  %306 = vmatprep.subr.mxu0 0.0
  %307 = vmatpush2.msra.mxu0 0.0
  %308 = vmatprep.subr.mxu0 0.0
  %309 = vmatpush2.msra.mxu0 0.0
  %310 = vmatprep.subr.mxu0 0.0
  %311 = vmatpush2.msra.mxu0 0.0
  %312 = vmatprep.mubr.f32.mxu0 0.0
  %313 = vmatmul.mubr.f32.gmra.mxu0 %v246
  %v314 = vpop.f32.mrf.mxu0
  %v315 = vadd.f32 0.0, %v314
  %v316 = vpop.f32.mrf.mxu0
  %317 = vdwg.mxu0
  %v318 = vadd.f32 %v243, %v315
  %v319 = vxor.u32 %v318, 2147483648
  %v320 = vmul.f32 %v319, 1.442695
  %v321 = vpow.pop %v320
  %v322 = vadd.f32 %v321, 1.0
  %v323 = vrcp.pop %v322
  %v324 = vmul.f32 1.0, %v323
  %v325 = vtanh.pop %v318
  %v326 = vmul.f32 %v324, %v222
  %328 = vrot.lane.b32.xlu0 %v325, 64
  %v329 = vpop.permute.xlu0 %328
  %v331 = vmul.f32 %v324, %v329
  %333 = vrot.lane.b32.xlu0 %v331, 32
  %v334 = vpop.permute.xlu0 %333
  %v336 = vadd.f32 %v326, %v334
  %v337 = vtanh.pop %v336
  %339 = vrot.lane.b32.xlu0 %v337, 64
  %v340 = vpop.permute.xlu0 %339
  %v342 = vmul.f32 %v324, %v340
  %v345 = vunpack.c.l.s4 1983009808
  %v346 = vunpack.c.0.s8 %v345
  %v347 = vlaneseq
  %v348 = vshrl.u32 %v347, 7
  %v349 = vsub.s32 %v346, %v348
  %v350 = vrot.slane %v342, %v349
  %351 = vrot.lane.b32.xlu0 %v350, 96
  %v352 = vpop.permute.xlu0 %351
  %vm354 = vcmask 779776
  %355 = vst.msk [vmem:[%s2] sm:$0x3] %vm354, %v352
  %s356 = scalar_lea.vmem %s0, 6
  %v357 = vld [vmem:[%s356] sm:$0x3]
  %358 = vrot.lane.b32.xlu0 %v342, 32
  %v359 = vpop.permute.xlu0 %358
  %v360 = vsel %vm16, %v359, 0
  %362 = vmatprep.subr.mxu0 0.0
  %363 = vmatpush1.msra.mxu0 0.0
  %364 = vmatprep.subr.mxu0 0.0
  %365 = vmatpush1.msra.mxu0 0.0
  %366 = vmatprep.subr.mxu0 0.0
  %367 = vmatpush1.msra.mxu0 0.0
  %368 = vmatprep.subr.mxu0 0.0
  %369 = vmatpush1.msra.mxu0 0.0
  %370 = vmatprep.subr.mxu0 0.0
  %371 = vmatpush1.msra.mxu0 0.0
  %372 = vmatprep.subr.mxu0 0.0
  %373 = vmatpush1.msra.mxu0 0.0
  %374 = vmatprep.subr.mxu0 0.0
  %375 = vmatpush1.msra.mxu0 0.0
  %376 = vmatprep.subr.mxu0 0.0
  %377 = vmatpush1.msra.mxu0 0.0
  %378 = vmatprep.subr.mxu0 0.0
  %379 = vmatpush1.msra.mxu0 0.0
  %380 = vmatprep.subr.mxu0 0.0
  %381 = vmatpush1.msra.mxu0 0.0
  %382 = vmatprep.subr.mxu0 0.0
  %383 = vmatpush1.msra.mxu0 0.0
  %384 = vmatprep.subr.mxu0 0.0
  %385 = vmatpush1.msra.mxu0 0.0
  %386 = vmatprep.subr.mxu0 0.0
  %387 = vmatpush1.msra.mxu0 %v14
  %388 = vmatprep.subr.mxu0 0.0
  %389 = vmatpush1.msra.mxu0 %v13
  %390 = vmatprep.subr.mxu0 0.0
  %391 = vmatpush1.msra.mxu0 %v12
  %392 = vmatprep.subr.mxu0 0.0
  %393 = vmatpush1.msra.mxu0 %v11
  %394 = vmatprep.subr.mxu0 0.0
  %395 = vmatpush2.msra.mxu0 0.0
  %396 = vmatprep.subr.mxu0 0.0
  %397 = vmatpush2.msra.mxu0 0.0
  %398 = vmatprep.subr.mxu0 0.0
  %399 = vmatpush2.msra.mxu0 0.0
  %400 = vmatprep.subr.mxu0 0.0
  %401 = vmatpush2.msra.mxu0 0.0
  %402 = vmatprep.subr.mxu0 0.0
  %403 = vmatpush2.msra.mxu0 0.0
  %404 = vmatprep.subr.mxu0 0.0
  %405 = vmatpush2.msra.mxu0 0.0
  %406 = vmatprep.subr.mxu0 0.0
  %407 = vmatpush2.msra.mxu0 0.0
  %408 = vmatprep.subr.mxu0 0.0
  %409 = vmatpush2.msra.mxu0 0.0
  %410 = vmatprep.subr.mxu0 0.0
  %411 = vmatpush2.msra.mxu0 0.0
  %412 = vmatprep.subr.mxu0 0.0
  %413 = vmatpush2.msra.mxu0 0.0
  %414 = vmatprep.subr.mxu0 0.0
  %415 = vmatpush2.msra.mxu0 0.0
  %416 = vmatprep.subr.mxu0 0.0
  %417 = vmatpush2.msra.mxu0 0.0
  %418 = vmatprep.subr.mxu0 0.0
  %419 = vmatpush2.msra.mxu0 0.0
  %420 = vmatprep.subr.mxu0 0.0
  %421 = vmatpush2.msra.mxu0 0.0
  %422 = vmatprep.subr.mxu0 0.0
  %423 = vmatpush2.msra.mxu0 0.0
  %424 = vmatprep.subr.mxu0 0.0
  %425 = vmatpush2.msra.mxu0 0.0
  %426 = vmatprep.mubr.f32.mxu0 0.0
  %427 = vmatmul.mubr.f32.gmra.mxu0 %v360
  %v428 = vpop.f32.mrf.mxu0
  %v429 = vadd.f32 0.0, %v428
  %v430 = vpop.f32.mrf.mxu0
  %431 = vdwg.mxu0
  %v432 = vadd.f32 %v357, %v429
  %v433 = vxor.u32 %v432, 2147483648
  %v434 = vmul.f32 %v433, 1.442695
  %v435 = vpow.pop %v434
  %v436 = vadd.f32 %v435, 1.0
  %v437 = vrcp.pop %v436
  %v438 = vmul.f32 1.0, %v437
  %v439 = vtanh.pop %v432
  %v440 = vmul.f32 %v438, %v336
  %442 = vrot.lane.b32.xlu0 %v439, 64
  %v443 = vpop.permute.xlu0 %442
  %v445 = vmul.f32 %v438, %v443
  %447 = vrot.lane.b32.xlu0 %v445, 32
  %v448 = vpop.permute.xlu0 %447
  %v450 = vadd.f32 %v440, %v448
  %v451 = vtanh.pop %v450
  %453 = vrot.lane.b32.xlu0 %v451, 64
  %v454 = vpop.permute.xlu0 %453
  %v456 = vmul.f32 %v438, %v454
  %vm457 = vcmask 1042176
  %458 = vst.msk [vmem:[%s2] sm:$0x3] %vm457, %v456
  %s459 = scalar_lea.vmem %s0, 8
  %v460 = vld [vmem:[%s459] sm:$0x3]
  %462 = vrot.lane.b32.xlu0 %v456, 32
  %v463 = vpop.permute.xlu0 %462
  %v464 = vsel %vm16, %v463, 0
  %466 = vmatprep.subr.mxu0 0.0
  %467 = vmatpush1.msra.mxu0 0.0
  %468 = vmatprep.subr.mxu0 0.0
  %469 = vmatpush1.msra.mxu0 0.0
  %470 = vmatprep.subr.mxu0 0.0
  %471 = vmatpush1.msra.mxu0 0.0
  %472 = vmatprep.subr.mxu0 0.0
  %473 = vmatpush1.msra.mxu0 0.0
  %474 = vmatprep.subr.mxu0 0.0
  %475 = vmatpush1.msra.mxu0 0.0
  %476 = vmatprep.subr.mxu0 0.0
  %477 = vmatpush1.msra.mxu0 0.0
  %478 = vmatprep.subr.mxu0 0.0
  %479 = vmatpush1.msra.mxu0 0.0
  %480 = vmatprep.subr.mxu0 0.0
  %481 = vmatpush1.msra.mxu0 0.0
  %482 = vmatprep.subr.mxu0 0.0
  %483 = vmatpush1.msra.mxu0 0.0
  %484 = vmatprep.subr.mxu0 0.0
  %485 = vmatpush1.msra.mxu0 0.0
  %486 = vmatprep.subr.mxu0 0.0
  %487 = vmatpush1.msra.mxu0 0.0
  %488 = vmatprep.subr.mxu0 0.0
  %489 = vmatpush1.msra.mxu0 0.0
  %490 = vmatprep.subr.mxu0 0.0
  %491 = vmatpush1.msra.mxu0 %v14
  %492 = vmatprep.subr.mxu0 0.0
  %493 = vmatpush1.msra.mxu0 %v13
  %494 = vmatprep.subr.mxu0 0.0
  %495 = vmatpush1.msra.mxu0 %v12
  %496 = vmatprep.subr.mxu0 0.0
  %497 = vmatpush1.msra.mxu0 %v11
  %498 = vmatprep.subr.mxu0 0.0
  %499 = vmatpush2.msra.mxu0 0.0
  %500 = vmatprep.subr.mxu0 0.0
  %501 = vmatpush2.msra.mxu0 0.0
  %502 = vmatprep.subr.mxu0 0.0
  %503 = vmatpush2.msra.mxu0 0.0
  %504 = vmatprep.subr.mxu0 0.0
  %505 = vmatpush2.msra.mxu0 0.0
  %506 = vmatprep.subr.mxu0 0.0
  %507 = vmatpush2.msra.mxu0 0.0
  %508 = vmatprep.subr.mxu0 0.0
  %509 = vmatpush2.msra.mxu0 0.0
  %510 = vmatprep.subr.mxu0 0.0
  %511 = vmatpush2.msra.mxu0 0.0
  %512 = vmatprep.subr.mxu0 0.0
  %513 = vmatpush2.msra.mxu0 0.0
  %514 = vmatprep.subr.mxu0 0.0
  %515 = vmatpush2.msra.mxu0 0.0
  %516 = vmatprep.subr.mxu0 0.0
  %517 = vmatpush2.msra.mxu0 0.0
  %518 = vmatprep.subr.mxu0 0.0
  %519 = vmatpush2.msra.mxu0 0.0
  %520 = vmatprep.subr.mxu0 0.0
  %521 = vmatpush2.msra.mxu0 0.0
  %522 = vmatprep.subr.mxu0 0.0
  %523 = vmatpush2.msra.mxu0 0.0
  %524 = vmatprep.subr.mxu0 0.0
  %525 = vmatpush2.msra.mxu0 0.0
  %526 = vmatprep.subr.mxu0 0.0
  %527 = vmatpush2.msra.mxu0 0.0
  %528 = vmatprep.subr.mxu0 0.0
  %529 = vmatpush2.msra.mxu0 0.0
  %530 = vmatprep.mubr.f32.mxu0 0.0
  %531 = vmatmul.mubr.f32.gmra.mxu0 %v464
  %v532 = vpop.f32.mrf.mxu0
  %v533 = vadd.f32 0.0, %v532
  %v534 = vpop.f32.mrf.mxu0
  %535 = vdwg.mxu0
  %v536 = vadd.f32 %v460, %v533
  %v537 = vxor.u32 %v536, 2147483648
  %v538 = vmul.f32 %v537, 1.442695
  %v539 = vpow.pop %v538
  %v540 = vadd.f32 %v539, 1.0
  %v541 = vrcp.pop %v540
  %v542 = vmul.f32 1.0, %v541
  %v543 = vtanh.pop %v536
  %v544 = vmul.f32 %v542, %v450
  %546 = vrot.lane.b32.xlu0 %v543, 64
  %v547 = vpop.permute.xlu0 %546
  %v549 = vmul.f32 %v542, %v547
  %551 = vrot.lane.b32.xlu0 %v549, 32
  %v552 = vpop.permute.xlu0 %551
  %v554 = vadd.f32 %v544, %v552
  %v555 = vtanh.pop %v554
  %557 = vrot.lane.b32.xlu0 %v555, 64
  %v558 = vpop.permute.xlu0 %557
  %v560 = vmul.f32 %v542, %v558
  %v563 = vunpack.c.l.s4 1983009808
  %v564 = vunpack.c.0.s8 %v563
  %v565 = vlaneseq
  %v566 = vshrl.u32 %v565, 7
  %v567 = vsub.s32 %v564, %v566
  %v568 = vrot.slane %v560, %v567
  %569 = vrot.lane.b32.xlu0 %v568, 32
  %v570 = vpop.permute.xlu0 %569
  %572 = vst.msk [vmem:[%s2 + $0x2] sm:$0x3] %vm126, %v570
  %s573 = scalar_lea.vmem %s0, 10
  %v574 = vld [vmem:[%s573] sm:$0x3]
  %575 = vrot.lane.b32.xlu0 %v560, 32
  %v576 = vpop.permute.xlu0 %575
  %v577 = vsel %vm16, %v576, 0
  %579 = vmatprep.subr.mxu0 0.0
  %580 = vmatpush1.msra.mxu0 0.0
  %581 = vmatprep.subr.mxu0 0.0
  %582 = vmatpush1.msra.mxu0 0.0
  %583 = vmatprep.subr.mxu0 0.0
  %584 = vmatpush1.msra.mxu0 0.0
  %585 = vmatprep.subr.mxu0 0.0
  %586 = vmatpush1.msra.mxu0 0.0
  %587 = vmatprep.subr.mxu0 0.0
  %588 = vmatpush1.msra.mxu0 0.0
  %589 = vmatprep.subr.mxu0 0.0
  %590 = vmatpush1.msra.mxu0 0.0
  %591 = vmatprep.subr.mxu0 0.0
  %592 = vmatpush1.msra.mxu0 0.0
  %593 = vmatprep.subr.mxu0 0.0
  %594 = vmatpush1.msra.mxu0 0.0
  %595 = vmatprep.subr.mxu0 0.0
  %596 = vmatpush1.msra.mxu0 0.0
  %597 = vmatprep.subr.mxu0 0.0
  %598 = vmatpush1.msra.mxu0 0.0
  %599 = vmatprep.subr.mxu0 0.0
  %600 = vmatpush1.msra.mxu0 0.0
  %601 = vmatprep.subr.mxu0 0.0
  %602 = vmatpush1.msra.mxu0 0.0
  %603 = vmatprep.subr.mxu0 0.0
  %604 = vmatpush1.msra.mxu0 %v14
  %605 = vmatprep.subr.mxu0 0.0
  %606 = vmatpush1.msra.mxu0 %v13
  %607 = vmatprep.subr.mxu0 0.0
  %608 = vmatpush1.msra.mxu0 %v12
  %609 = vmatprep.subr.mxu0 0.0
  %610 = vmatpush1.msra.mxu0 %v11
  %611 = vmatprep.subr.mxu0 0.0
  %612 = vmatpush2.msra.mxu0 0.0
  %613 = vmatprep.subr.mxu0 0.0
  %614 = vmatpush2.msra.mxu0 0.0
  %615 = vmatprep.subr.mxu0 0.0
  %616 = vmatpush2.msra.mxu0 0.0
  %617 = vmatprep.subr.mxu0 0.0
  %618 = vmatpush2.msra.mxu0 0.0
  %619 = vmatprep.subr.mxu0 0.0
  %620 = vmatpush2.msra.mxu0 0.0
  %621 = vmatprep.subr.mxu0 0.0
  %622 = vmatpush2.msra.mxu0 0.0
  %623 = vmatprep.subr.mxu0 0.0
  %624 = vmatpush2.msra.mxu0 0.0
  %625 = vmatprep.subr.mxu0 0.0
  %626 = vmatpush2.msra.mxu0 0.0
  %627 = vmatprep.subr.mxu0 0.0
  %628 = vmatpush2.msra.mxu0 0.0
  %629 = vmatprep.subr.mxu0 0.0
  %630 = vmatpush2.msra.mxu0 0.0
  %631 = vmatprep.subr.mxu0 0.0
  %632 = vmatpush2.msra.mxu0 0.0
  %633 = vmatprep.subr.mxu0 0.0
  %634 = vmatpush2.msra.mxu0 0.0
  %635 = vmatprep.subr.mxu0 0.0
  %636 = vmatpush2.msra.mxu0 0.0
  %637 = vmatprep.subr.mxu0 0.0
  %638 = vmatpush2.msra.mxu0 0.0
  %639 = vmatprep.subr.mxu0 0.0
  %640 = vmatpush2.msra.mxu0 0.0
  %641 = vmatprep.subr.mxu0 0.0
  %642 = vmatpush2.msra.mxu0 0.0
  %643 = vmatprep.mubr.f32.mxu0 0.0
  %644 = vmatmul.mubr.f32.gmra.mxu0 %v577
  %v645 = vpop.f32.mrf.mxu0
  %v646 = vadd.f32 0.0, %v645
  %v647 = vpop.f32.mrf.mxu0
  %648 = vdwg.mxu0
  %v649 = vadd.f32 %v574, %v646
  %v650 = vxor.u32 %v649, 2147483648
  %v651 = vmul.f32 %v650, 1.442695
  %v652 = vpow.pop %v651
  %v653 = vadd.f32 %v652, 1.0
  %v654 = vrcp.pop %v653
  %v655 = vmul.f32 1.0, %v654
  %v656 = vtanh.pop %v649
  %v657 = vmul.f32 %v655, %v554
  %659 = vrot.lane.b32.xlu0 %v656, 64
  %v660 = vpop.permute.xlu0 %659
  %v662 = vmul.f32 %v655, %v660
  %664 = vrot.lane.b32.xlu0 %v662, 32
  %v665 = vpop.permute.xlu0 %664
  %v667 = vadd.f32 %v657, %v665
  %v668 = vtanh.pop %v667
  %670 = vrot.lane.b32.xlu0 %v668, 64
  %v671 = vpop.permute.xlu0 %670
  %v673 = vmul.f32 %v655, %v671
  %v676 = vunpack.c.l.s4 1983009808
  %v677 = vunpack.c.0.s8 %v676
  %v678 = vlaneseq
  %v679 = vshrl.u32 %v678, 7
  %v680 = vsub.s32 %v677, %v679
  %v681 = vrot.slane %v673, %v680
  %682 = vrot.lane.b32.xlu0 %v681, 64
  %v683 = vpop.permute.xlu0 %682
  %685 = vst.msk [vmem:[%s2 + $0x2] sm:$0x3] %vm240, %v683
  %s686 = scalar_lea.vmem %s0, 12
  %v687 = vld [vmem:[%s686] sm:$0x3]
  %688 = vrot.lane.b32.xlu0 %v673, 32
  %v689 = vpop.permute.xlu0 %688
  %v690 = vsel %vm16, %v689, 0
  %692 = vmatprep.subr.mxu0 0.0
  %693 = vmatpush1.msra.mxu0 0.0
  %694 = vmatprep.subr.mxu0 0.0
  %695 = vmatpush1.msra.mxu0 0.0
  %696 = vmatprep.subr.mxu0 0.0
  %697 = vmatpush1.msra.mxu0 0.0
  %698 = vmatprep.subr.mxu0 0.0
  %699 = vmatpush1.msra.mxu0 0.0
  %700 = vmatprep.subr.mxu0 0.0
  %701 = vmatpush1.msra.mxu0 0.0
  %702 = vmatprep.subr.mxu0 0.0
  %703 = vmatpush1.msra.mxu0 0.0
  %704 = vmatprep.subr.mxu0 0.0
  %705 = vmatpush1.msra.mxu0 0.0
  %706 = vmatprep.subr.mxu0 0.0
  %707 = vmatpush1.msra.mxu0 0.0
  %708 = vmatprep.subr.mxu0 0.0
  %709 = vmatpush1.msra.mxu0 0.0
  %710 = vmatprep.subr.mxu0 0.0
  %711 = vmatpush1.msra.mxu0 0.0
  %712 = vmatprep.subr.mxu0 0.0
  %713 = vmatpush1.msra.mxu0 0.0
  %714 = vmatprep.subr.mxu0 0.0
  %715 = vmatpush1.msra.mxu0 0.0
  %716 = vmatprep.subr.mxu0 0.0
  %717 = vmatpush1.msra.mxu0 %v14
  %718 = vmatprep.subr.mxu0 0.0
  %719 = vmatpush1.msra.mxu0 %v13
  %720 = vmatprep.subr.mxu0 0.0
  %721 = vmatpush1.msra.mxu0 %v12
  %722 = vmatprep.subr.mxu0 0.0
  %723 = vmatpush1.msra.mxu0 %v11
  %724 = vmatprep.subr.mxu0 0.0
  %725 = vmatpush2.msra.mxu0 0.0
  %726 = vmatprep.subr.mxu0 0.0
  %727 = vmatpush2.msra.mxu0 0.0
  %728 = vmatprep.subr.mxu0 0.0
  %729 = vmatpush2.msra.mxu0 0.0
  %730 = vmatprep.subr.mxu0 0.0
  %731 = vmatpush2.msra.mxu0 0.0
  %732 = vmatprep.subr.mxu0 0.0
  %733 = vmatpush2.msra.mxu0 0.0
  %734 = vmatprep.subr.mxu0 0.0
  %735 = vmatpush2.msra.mxu0 0.0
  %736 = vmatprep.subr.mxu0 0.0
  %737 = vmatpush2.msra.mxu0 0.0
  %738 = vmatprep.subr.mxu0 0.0
  %739 = vmatpush2.msra.mxu0 0.0
  %740 = vmatprep.subr.mxu0 0.0
  %741 = vmatpush2.msra.mxu0 0.0
  %742 = vmatprep.subr.mxu0 0.0
  %743 = vmatpush2.msra.mxu0 0.0
  %744 = vmatprep.subr.mxu0 0.0
  %745 = vmatpush2.msra.mxu0 0.0
  %746 = vmatprep.subr.mxu0 0.0
  %747 = vmatpush2.msra.mxu0 0.0
  %748 = vmatprep.subr.mxu0 0.0
  %749 = vmatpush2.msra.mxu0 0.0
  %750 = vmatprep.subr.mxu0 0.0
  %751 = vmatpush2.msra.mxu0 0.0
  %752 = vmatprep.subr.mxu0 0.0
  %753 = vmatpush2.msra.mxu0 0.0
  %754 = vmatprep.subr.mxu0 0.0
  %755 = vmatpush2.msra.mxu0 0.0
  %756 = vmatprep.mubr.f32.mxu0 0.0
  %757 = vmatmul.mubr.f32.gmra.mxu0 %v690
  %v758 = vpop.f32.mrf.mxu0
  %v759 = vadd.f32 0.0, %v758
  %v760 = vpop.f32.mrf.mxu0
  %761 = vdwg.mxu0
  %v762 = vadd.f32 %v687, %v759
  %v763 = vxor.u32 %v762, 2147483648
  %v764 = vmul.f32 %v763, 1.442695
  %v765 = vpow.pop %v764
  %v766 = vadd.f32 %v765, 1.0
  %v767 = vrcp.pop %v766
  %v768 = vmul.f32 1.0, %v767
  %v769 = vtanh.pop %v762
  %v770 = vmul.f32 %v768, %v667
  %772 = vrot.lane.b32.xlu0 %v769, 64
  %v773 = vpop.permute.xlu0 %772
  %v775 = vmul.f32 %v768, %v773
  %777 = vrot.lane.b32.xlu0 %v775, 32
  %v778 = vpop.permute.xlu0 %777
  %v780 = vadd.f32 %v770, %v778
  %v781 = vtanh.pop %v780
  %783 = vrot.lane.b32.xlu0 %v781, 64
  %v784 = vpop.permute.xlu0 %783
  %v786 = vmul.f32 %v768, %v784
  %v789 = vunpack.c.l.s4 1983009808
  %v790 = vunpack.c.0.s8 %v789
  %v791 = vlaneseq
  %v792 = vshrl.u32 %v791, 7
  %v793 = vsub.s32 %v790, %v792
  %v794 = vrot.slane %v786, %v793
  %795 = vrot.lane.b32.xlu0 %v794, 96
  %v796 = vpop.permute.xlu0 %795
  %798 = vst.msk [vmem:[%s2 + $0x2] sm:$0x3] %vm354, %v796
  %s799 = scalar_lea.vmem %s0, 14
  %v800 = vld [vmem:[%s799] sm:$0x3]
  %801 = vrot.lane.b32.xlu0 %v786, 32
  %v802 = vpop.permute.xlu0 %801
  %v803 = vsel %vm16, %v802, 0
  %805 = vmatprep.subr.mxu0 0.0
  %806 = vmatpush1.msra.mxu0 0.0
  %807 = vmatprep.subr.mxu0 0.0
  %808 = vmatpush1.msra.mxu0 0.0
  %809 = vmatprep.subr.mxu0 0.0
  %810 = vmatpush1.msra.mxu0 0.0
  %811 = vmatprep.subr.mxu0 0.0
  %812 = vmatpush1.msra.mxu0 0.0
  %813 = vmatprep.subr.mxu0 0.0
  %814 = vmatpush1.msra.mxu0 0.0
  %815 = vmatprep.subr.mxu0 0.0
  %816 = vmatpush1.msra.mxu0 0.0
  %817 = vmatprep.subr.mxu0 0.0
  %818 = vmatpush1.msra.mxu0 0.0
  %819 = vmatprep.subr.mxu0 0.0
  %820 = vmatpush1.msra.mxu0 0.0
  %821 = vmatprep.subr.mxu0 0.0
  %822 = vmatpush1.msra.mxu0 0.0
  %823 = vmatprep.subr.mxu0 0.0
  %824 = vmatpush1.msra.mxu0 0.0
  %825 = vmatprep.subr.mxu0 0.0
  %826 = vmatpush1.msra.mxu0 0.0
  %827 = vmatprep.subr.mxu0 0.0
  %828 = vmatpush1.msra.mxu0 0.0
  %829 = vmatprep.subr.mxu0 0.0
  %830 = vmatpush1.msra.mxu0 %v14
  %831 = vmatprep.subr.mxu0 0.0
  %832 = vmatpush1.msra.mxu0 %v13
  %833 = vmatprep.subr.mxu0 0.0
  %834 = vmatpush1.msra.mxu0 %v12
  %835 = vmatprep.subr.mxu0 0.0
  %836 = vmatpush1.msra.mxu0 %v11
  %837 = vmatprep.subr.mxu0 0.0
  %838 = vmatpush2.msra.mxu0 0.0
  %839 = vmatprep.subr.mxu0 0.0
  %840 = vmatpush2.msra.mxu0 0.0
  %841 = vmatprep.subr.mxu0 0.0
  %842 = vmatpush2.msra.mxu0 0.0
  %843 = vmatprep.subr.mxu0 0.0
  %844 = vmatpush2.msra.mxu0 0.0
  %845 = vmatprep.subr.mxu0 0.0
  %846 = vmatpush2.msra.mxu0 0.0
  %847 = vmatprep.subr.mxu0 0.0
  %848 = vmatpush2.msra.mxu0 0.0
  %849 = vmatprep.subr.mxu0 0.0
  %850 = vmatpush2.msra.mxu0 0.0
  %851 = vmatprep.subr.mxu0 0.0
  %852 = vmatpush2.msra.mxu0 0.0
  %853 = vmatprep.subr.mxu0 0.0
  %854 = vmatpush2.msra.mxu0 0.0
  %855 = vmatprep.subr.mxu0 0.0
  %856 = vmatpush2.msra.mxu0 0.0
  %857 = vmatprep.subr.mxu0 0.0
  %858 = vmatpush2.msra.mxu0 0.0
  %859 = vmatprep.subr.mxu0 0.0
  %860 = vmatpush2.msra.mxu0 0.0
  %861 = vmatprep.subr.mxu0 0.0
  %862 = vmatpush2.msra.mxu0 0.0
  %863 = vmatprep.subr.mxu0 0.0
  %864 = vmatpush2.msra.mxu0 0.0
  %865 = vmatprep.subr.mxu0 0.0
  %866 = vmatpush2.msra.mxu0 0.0
  %867 = vmatprep.subr.mxu0 0.0
  %868 = vmatpush2.msra.mxu0 0.0
  %869 = vmatprep.mubr.f32.mxu0 0.0
  %870 = vmatmul.mubr.f32.gmra.mxu0 %v803
  %v871 = vpop.f32.mrf.mxu0
  %v872 = vadd.f32 0.0, %v871
  %v873 = vpop.f32.mrf.mxu0
  %874 = vdwg.mxu0
  %v875 = vadd.f32 %v800, %v872
  %v876 = vxor.u32 %v875, 2147483648
  %v877 = vmul.f32 %v876, 1.442695
  %v878 = vpow.pop %v877
  %v879 = vadd.f32 %v878, 1.0
  %v880 = vrcp.pop %v879
  %v881 = vmul.f32 1.0, %v880
  %v882 = vtanh.pop %v875
  %v883 = vmul.f32 %v881, %v780
  %885 = vrot.lane.b32.xlu0 %v882, 64
  %v886 = vpop.permute.xlu0 %885
  %v888 = vmul.f32 %v881, %v886
  %890 = vrot.lane.b32.xlu0 %v888, 32
  %v891 = vpop.permute.xlu0 %890
  %v893 = vadd.f32 %v883, %v891
  %v894 = vtanh.pop %v893
  %896 = vrot.lane.b32.xlu0 %v894, 64
  %v897 = vpop.permute.xlu0 %896
  %v899 = vmul.f32 %v881, %v897
  %900 = vst.msk [vmem:[%s2 + $0x2] sm:$0x3] %vm457, %v899
  // Predicated region
  $region10: #{program_encoder_forward.1} parent=0 // pred_check
    _
  $region11: #{program_encoder_forward.1} parent=0 // pred_check_branch
    %902 = sbr.rel (0) target = $region13
  $region12: #{program_encoder_forward.1} parent=0 // pred_region
    _
  $region13: #{program_encoder_forward.1} parent=0 // pred_fallthru
    _
  // Predicated region
  $region14: #{program_encoder_forward.1} parent=0 // pred_check
    _
  $region15: #{program_encoder_forward.1} parent=0 // pred_check_branch
    %904 = sbr.rel (0) target = $region17
  $region16: #{program_encoder_forward.1} parent=0 // pred_region
    _
  $region17: #{program_encoder_forward.1} parent=0 // pred_fallthru
    _

</llo_original>
